<compile_context>
chip_gen: v6e
topology: v6e:2x2x1
jax: 0.10.0
libtpu: 0.0.40
codegen_flags: <defaults>
</compile_context>

<pallas_src>
import math
from functools import partial

import jax
import jax.numpy as jnp
from jax import lax
from jax.experimental import pallas as pl
from jax.experimental.pallas import tpu as pltpu

_DEFAULT_BATCH_TILE = 4096  # rows/step; ~16 MiB VMEM footprint for the 54x6 cube


# --------------------------------------------------------------------------- #
# Kernels
# --------------------------------------------------------------------------- #
def _one_hot_kernel(x_ref, expand_ref, didx_ref, o_ref):
    # x_ref:      (TB, S)     int8/int32   sticker colors
    # expand_ref: (S, S*D)    bf16 (f32 if depth>256) 0/1 replication matrix
    # didx_ref:   (1, S*D)    compare dtype: column -> class index (hoisted mod)
    # o_ref:      (TB, S*D)   out dtype    flattened one-hot
    xe = x_ref[...].astype(expand_ref.dtype)                   # VPU widen (exact)
    # MXU matmul replicates each sticker value D times along the lane axis,
    # producing (TB, S*D) "which class lives at column j" values w/o a gather.
    x_rep = jnp.dot(xe, expand_ref[...],
                    preferred_element_type=didx_ref.dtype)     # (TB, S*D)
    o_ref[...] = (x_rep == didx_ref[...]).astype(o_ref.dtype)  # one-hot + cast


def _cast_kernel(x_ref, o_ref):
    o_ref[...] = x_ref[...].astype(o_ref.dtype)


# --------------------------------------------------------------------------- #
# Helpers
# --------------------------------------------------------------------------- #
def _round_up(x, m):
    return ((x + m - 1) // m) * m


def _pick_batch_tile(b, batch_tile):
    """Row tile: big enough to amortize the ~0.35us/step grid overhead, small
    enough for VMEM, and giving >= 2 grid steps on mid/large batches so v7x's
    two TensorCores both get work via the "parallel" batch axis."""
    if b <= 32:
        return b                                    # single block, full dims
    tb = min(batch_tile, _round_up(pl.cdiv(b, 2), 32))
    return max(32, tb)


def _compare_dtype(one_hot_depth):
    """bf16 compare/intermediate only where it helps (v6e/v7x have a bf16 VPU)
    and is exact (integer values <= 256). v5e/older: f32."""
    if one_hot_depth > 256:
        return jnp.float32
    try:
        kind = jax.devices()[0].device_kind.lower()
    except Exception:
        return jnp.float32
    if "v6" in kind or "v7" in kind:
        return jnp.bfloat16
    return jnp.float32


# --------------------------------------------------------------------------- #
# Public wrapper
# --------------------------------------------------------------------------- #
def cube3_process_states(states_nnet, state_dim, one_hot_depth, *,
                         batch_tile=_DEFAULT_BATCH_TILE,
                         out_dtype=jnp.float32):
    """Pallas implementation of Cube3ProcessStates.forward.

    out_dtype=jnp.bfloat16 is an optional API extension (0/1 values are exact
    in bf16) that halves the output-write bytes of this write-bound kernel.
    """
    x = states_nnet
    parallel_sem = ("parallel",)

    # ----------------------------- one-hot path --------------------------- #
    if one_hot_depth > 0:
        s, d = state_dim, one_hot_depth
        sd = s * d
        if x.ndim != 2 or x.shape[1] != s:
            x = x.reshape(-1, s)            # mirrors torch's .view(-1, S*D)
        b = x.shape[0]

        # Keep narrow integer inputs narrow (4x less input HBM read). bitcast,
        # not astype, so no extra XLA pass copies the input beforehand.
        if x.dtype == jnp.uint8:
            x = lax.bitcast_convert_type(x, jnp.int8)
        elif x.dtype not in (jnp.int8, jnp.int32):
            x = x.astype(jnp.int32)

        mm_dtype = jnp.bfloat16 if d <= 256 else jnp.float32    # MXU input dtype
        cmp_dtype = _compare_dtype(d)                           # intermediate/compare

        # Constant 0/1 replication matrix: expand[s_, s_*D + d_] = 1.
        expand = (jnp.arange(sd)[None, :] // d
                  == jnp.arange(s)[:, None]).astype(mm_dtype)   # (S, S*D)
        # Per-column target class index, hoisted out of the kernel.
        d_idx = (jnp.arange(sd, dtype=jnp.int32) % d).astype(cmp_dtype).reshape(1, sd)

        tb = _pick_batch_tile(b, batch_tile)
        grid = (pl.cdiv(b, tb),)

        # Per-step VMEM footprint: double-buffered in/out + intermediates + consts.
        in_item = jnp.dtype(x.dtype).itemsize
        out_item = jnp.dtype(out_dtype).itemsize
        cmp_item = jnp.dtype(cmp_dtype).itemsize
        mm_item = jnp.dtype(mm_dtype).itemsize
        vmem_need = (2 * tb * (s * in_item + sd * out_item)
                     + tb * sd * (cmp_item + out_item)
                     + (s + 1) * sd * max(mm_item, cmp_item))
        vmem_limit = int(min(max(vmem_need + (8 << 20), 32 << 20), 48 << 20))

        out = pl.pallas_call(
            _one_hot_kernel,
            out_shape=jax.ShapeDtypeStruct((b, sd), out_dtype),
            grid=grid,
            in_specs=[pl.BlockSpec((tb, s), lambda i: (i, 0)),
                      pl.BlockSpec((s, sd), lambda i: (0, 0)),
                      pl.BlockSpec((1, sd), lambda i: (0, 0))],
            out_specs=pl.BlockSpec((tb, sd), lambda i: (i, 0)),
            compiler_params=pltpu.CompilerParams(
                dimension_semantics=parallel_sem,
                vmem_limit_bytes=vmem_limit),
        )(x, expand, d_idx)
        return out

    # ----------------------------- cast path ------------------------------ #
    orig_shape = x.shape
    b = orig_shape[0]
    x2 = x.reshape(b, -1) if x.ndim != 2 else x
    s = x2.shape[1]

    # Lane-dense repack (free row-major view): fold rows into the lane axis so
    # stores are full-width vst instead of masked vst.msk on a <128-lane tail.
    pack = 1
    if s % 128 != 0:
        want = 128 // math.gcd(s, 128)
        if b % want == 0:
            pack = want
    xp = x2.reshape(b // pack, s * pack)
    rows, cols = xp.shape

    # Cap the row tile so the output block stays ~<= 4 MiB per step.
    out_item = jnp.dtype(out_dtype).itemsize
    tr_cap = max(32, _round_up((4 << 20) // (cols * out_item), 32))
    tr = _pick_batch_tile(rows, min(batch_tile, tr_cap))

    out = pl.pallas_call(
        _cast_kernel,
        out_shape=jax.ShapeDtypeStruct((rows, cols), out_dtype),
        grid=(pl.cdiv(rows, tr),),
        in_specs=[pl.BlockSpec((tr, cols), lambda i: (i, 0))],
        out_specs=pl.BlockSpec((tr, cols), lambda i: (i, 0)),
        compiler_params=pltpu.CompilerParams(dimension_semantics=parallel_sem),
    )(xp)
    return out.reshape(orig_shape)


# --------------------------------------------------------------------------- #
# Self-test
# --------------------------------------------------------------------------- #
if __name__ == "__main__":
    # Rubik's cube 3x3: 54 stickers, 6 colors.
    state_dim, one_hot_depth = 54, 6
    key = jax.random.PRNGKey(0)

    # --- main test: small batch, single tile -------------------------------
    batch = 8
    states = jax.random.randint(key, (batch, state_dim), 0, one_hot_depth,
                                dtype=jnp.int32).astype(jnp.int8)
    out = jax.block_until_ready(
        cube3_process_states(states, state_dim, one_hot_depth))
    ref = jax.nn.one_hot(states.astype(jnp.int32), one_hot_depth,
                         dtype=jnp.float32).reshape(batch, state_dim * one_hot_depth)
    assert out.shape == (batch, state_dim * one_hot_depth), out.shape
    assert out.dtype == jnp.float32
    assert bool(jnp.allclose(out, ref)), "mismatch vs reference one-hot (small)"

    # --- tiled test: multiple grid steps + partial last block --------------
    batch2 = 80
    states2 = jax.random.randint(jax.random.PRNGKey(1), (batch2, state_dim), 0,
                                 one_hot_depth, dtype=jnp.int32).astype(jnp.int8)
    out2 = jax.block_until_ready(
        cube3_process_states(states2, state_dim, one_hot_depth, batch_tile=32))
    ref2 = jax.nn.one_hot(states2.astype(jnp.int32), one_hot_depth,
                          dtype=jnp.float32).reshape(batch2,
                                                     state_dim * one_hot_depth)
    assert bool(jnp.allclose(out2, ref2)), "mismatch vs reference one-hot (tiled)"

    # --- uint8 input path (bitcast, no astype copy) -------------------------
    out_u8 = jax.block_until_ready(
        cube3_process_states(states.astype(jnp.uint8), state_dim, one_hot_depth))
    assert bool(jnp.allclose(out_u8, ref)), "mismatch vs reference one-hot (uint8)"

    # --- one_hot_depth == 0 path: plain float cast (unpacked, b=8) ----------
    out3 = jax.block_until_ready(cube3_process_states(states, state_dim, 0))
    assert out3.dtype == jnp.float32
    assert bool(jnp.allclose(out3, states.astype(jnp.float32))), "cast path mismatch"

    # --- one_hot_depth == 0 path: lane-dense repack (b % 64 == 0) -----------
    batch3 = 128
    states3 = jax.random.randint(jax.random.PRNGKey(2), (batch3, state_dim), 0,
                                 one_hot_depth, dtype=jnp.int32).astype(jnp.int8)
    out4 = jax.block_until_ready(cube3_process_states(states3, state_dim, 0))
    assert out4.shape == (batch3, state_dim)
    assert bool(jnp.allclose(out4, states3.astype(jnp.float32))), \
        "lane-dense cast path mismatch"

    print("KERNEL_OK")
</pallas_src>

<mosaic_0001>
module attributes {stable_mosaic.version = 11 : i64} {
  func.func @_one_hot_kernel(%arg0: i32, %arg1: memref<8x54xi8, #tpu.memory_space<vmem>>, %arg2: memref<54x324xbf16, #tpu.memory_space<vmem>>, %arg3: memref<1x324xf32, #tpu.memory_space<vmem>>, %arg4: memref<8x324xf32, #tpu.memory_space<vmem>>) attributes {dimension_semantics = [#tpu.dimension_semantics<parallel>], iteration_bounds = array<i64: 1>, scalar_prefetch = 0 : i64, scratch_operands = 0 : i64, tpu.core_type = #tpu.core_type<tc>, window_params = [{transform_indices = @transform_0, window_bounds = array<i64: 8, 54>}, {pipeline_mode = #tpu.pipeline_mode<synchronous>, transform_indices = @transform_1, window_bounds = array<i64: 54, 324>}, {pipeline_mode = #tpu.pipeline_mode<synchronous>, transform_indices = @transform_2, window_bounds = array<i64: 1, 324>}, {transform_indices = @transform_3, window_bounds = array<i64: 8, 324>}]} {
    %c0 = arith.constant 0 : index
    %c0_0 = arith.constant 0 : index
    %0 = vector.load %arg1[%c0, %c0_0] : memref<8x54xi8, #tpu.memory_space<vmem>>, vector<8x54xi8>
    %1 = arith.sitofp %0 : vector<8x54xi8> to vector<8x54xbf16>
    %c0_1 = arith.constant 0 : index
    %c0_2 = arith.constant 0 : index
    %2 = vector.load %arg2[%c0_1, %c0_2] : memref<54x324xbf16, #tpu.memory_space<vmem>>, vector<54x324xbf16>
    %cst = arith.constant dense<0.000000e+00> : vector<8x324xf32>
    %3 = tpu.matmul %1, %2, %cst {dimension_numbers = #tpu.dot_dimension_numbers<[1], [0], [0], [1], [0, 0, 1, 1], [], []>} : vector<8x54xbf16>, vector<54x324xbf16>, vector<8x324xf32> -> vector<8x324xf32>
    %c0_3 = arith.constant 0 : index
    %c0_4 = arith.constant 0 : index
    %4 = vector.load %arg3[%c0_3, %c0_4] : memref<1x324xf32, #tpu.memory_space<vmem>>, vector<1x324xf32>
    %5 = vector.broadcast %4 : vector<1x324xf32> to vector<8x324xf32>
    %6 = arith.cmpf oeq, %3, %5 : vector<8x324xf32>
    %7 = arith.extui %6 : vector<8x324xi1> to vector<8x324xi32>
    %8 = arith.sitofp %7 : vector<8x324xi32> to vector<8x324xf32>
    %c0_5 = arith.constant 0 : index
    %c0_6 = arith.constant 0 : index
    %9 = vector.load %arg4[%c0_5, %c0_6] : memref<8x324xf32, #tpu.memory_space<vmem>>, vector<8x324xf32>
    tpu.vector_store %arg4[%c0_5, %c0_6], %8 {strides = array<i32>} : memref<8x324xf32, #tpu.memory_space<vmem>>, vector<8x324xf32>,
    return
  }
  func.func @transform_0(%arg0: i32) -> (i32, i32) {
    %c0_i32 = arith.constant 0 : i32
    %c0_i32_0 = arith.constant 0 : i32
    return %arg0, %c0_i32 : i32, i32
  }
  func.func @transform_1(%arg0: i32) -> (i32, i32) {
    %c0_i32 = arith.constant 0 : i32
    %c0_i32_0 = arith.constant 0 : i32
    %c0_i32_1 = arith.constant 0 : i32
    return %c0_i32, %c0_i32_0 : i32, i32
  }
  func.func @transform_2(%arg0: i32) -> (i32, i32) {
    %c0_i32 = arith.constant 0 : i32
    %c0_i32_0 = arith.constant 0 : i32
    %c0_i32_1 = arith.constant 0 : i32
    return %c0_i32, %c0_i32_0 : i32, i32
  }
  func.func @transform_3(%arg0: i32) -> (i32, i32) {
    %c0_i32 = arith.constant 0 : i32
    %c0_i32_0 = arith.constant 0 : i32
    return %arg0, %c0_i32 : i32, i32
  }
}

</mosaic_0001>

<llo_original>
// kernel: tpu_custom_call.1
$region0: #{tpu_custom_call.1}
  #allocation0 [shape = 'u32[]', space=smem, size = 0x4, offset = 0x4, fixed_abs, tag = 'smem constant byte address 0x4 - core index']
  #allocation1 [shape = 'u32[144,128]{1,0:T(1,128)}', space=vmem, size = 0x12000, scoped, tag = 'internal scratch']
  %s0 = inlined_call_operand.hbm [shape: s8[8,54], index: 0, kind: input, shape index: {}]
  %s1 = inlined_call_operand.hbm [shape: bf16[54,324], index: 1, kind: input, shape index: {}]
  %s2 = inlined_call_operand.vmem [shape: f32[1,324], index: 2, kind: input, shape index: {}]
  %s3 = inlined_call_operand.hbm [shape: f32[8,324], index: 3, kind: output, shape index: {}]
  %s4 = sld [smem:[#allocation0]]
  $region30: #{tpu_custom_call.1} parent=0
    _
  %s6 = ssub.s32 1, %s4
  %s7 = scalar_select 0, %s6, %s4
  $region1: #{tpu_custom_call.1} parent=0
    #allocation2 [shape = 'u8[1024]{0}', space=vmem, size = 0x400, scoped, tag = 'input window, operand 0, single buffered']
    #allocation3 [shape = 's32[1]{0}', space=sflag, size = 0x4, scoped, tag = 'scoped memory for tpu_custom_call.1']
    #allocation4 [shape = 's32[1]{0}', space=sflag, size = 0x4, scoped, tag = 'scoped memory for tpu_custom_call.1']
    #allocation5 [shape = 'u8[43008]{0}', space=vmem, size = 0xa800, scoped, tag = 'input window, operand 1, single buffered']
    #allocation6 [shape = 's32[1]{0}', space=sflag, size = 0x4, scoped, tag = 'scoped memory for tpu_custom_call.1']
    #allocation7 [shape = 'u8[12288]{0}', space=vmem, size = 0x3000, scoped, tag = 'output window, operand 0, single buffered']
    %8 = vsyncpa [#allocation3], 0
    %9 = vsyncpa [#allocation6], 0
    %10 = vsyncpa [#allocation4], 0
    // Predicated region
    $region2: #{tpu_custom_call.1} parent=1 // pred_check
      _
    $region3: #{tpu_custom_call.1} parent=1 // pred_check_branch
      %12 = sbr.rel (0) target = $region5
    $region4: #{tpu_custom_call.1} parent=1 // pred_region
      %s14 = ssub.s32 32, 32
      %15 = vsyncadd [#allocation3], %s14
      %s17 = sshll.u32 [#allocation2], 4
      %s18 = int_to_ptr.vmem [resolvable:$true] %s17
      %20 = dma.hbm_to_vmem [thread:$0]  %s0, 32, %s18, [#allocation3]
    $region5: #{tpu_custom_call.1} parent=1 // pred_fallthru
      _
    // Predicated region
    $region6: #{tpu_custom_call.1} parent=1 // pred_check
      _
    $region7: #{tpu_custom_call.1} parent=1 // pred_check_branch
      %22 = sbr.rel (0) target = $region9
    $region8: #{tpu_custom_call.1} parent=1 // pred_region
      %s24 = ssub.s32 1344, 1344
      %25 = vsyncadd [#allocation6], %s24
      %s26 = sshll.u32 [#allocation5], 4
      %s27 = int_to_ptr.vmem [resolvable:$true] %s26
      %32 = dma.hbm_to_vmem [thread:$0]  %s1, 1344, %s27, [#allocation6], 192, 192, 12
    $region9: #{tpu_custom_call.1} parent=1 // pred_fallthru
      _
    // Predicated region
    $region10: #{tpu_custom_call.1} parent=1 // pred_check
      _
    $region11: #{tpu_custom_call.1} parent=1 // pred_check_branch
      %34 = sbr.rel (0) target = $region13
    $region12: #{tpu_custom_call.1} parent=1 // pred_region
      _
    $region13: #{tpu_custom_call.1} parent=1 // pred_fallthru
      _
    // Predicated region
    $region14: #{tpu_custom_call.1} parent=1 // pred_check
      _
    $region15: #{tpu_custom_call.1} parent=1 // pred_check_branch
      %36 = sbr.rel (0) target = $region17
    $region16: #{tpu_custom_call.1} parent=1 // pred_region
      %37 = dma.done [#allocation3], 32
    $region17: #{tpu_custom_call.1} parent=1 // pred_fallthru
      _
    // Predicated region
    $region18: #{tpu_custom_call.1} parent=1 // pred_check
      _
    $region19: #{tpu_custom_call.1} parent=1 // pred_check_branch
      %39 = sbr.rel (0) target = $region21
    $region20: #{tpu_custom_call.1} parent=1 // pred_region
      %40 = dma.done [#allocation6], 1344
    $region21: #{tpu_custom_call.1} parent=1 // pred_fallthru
      _
    %v42 = vld [vmem:[#allocation2] sm:$0x3]
    %v43 = vunpack.c.l.s8.bf16 %v42
    %v44 = vld [vmem:[#allocation5] sm:$0xff]
    %v45 = vld [vmem:[#allocation5 + $0x8] sm:$0xf]
    %v46 = vld [vmem:[#allocation5 + $0xc] sm:$0xff]
    %v47 = vld [vmem:[#allocation5 + $0x14] sm:$0xf]
    %v48 = vld [vmem:[#allocation5 + $0x18] sm:$0xff]
    %v49 = vld [vmem:[#allocation5 + $0x20] sm:$0xf]
    %v50 = vld [vmem:[#allocation5 + $0x24] sm:$0xff]
    %v51 = vld [vmem:[#allocation5 + $0x2c] sm:$0xf]
    %v52 = vld [vmem:[#allocation5 + $0x30] sm:$0xff]
    %v53 = vld [vmem:[#allocation5 + $0x38] sm:$0xf]
    %v54 = vld [vmem:[#allocation5 + $0x3c] sm:$0xff]
    %v55 = vld [vmem:[#allocation5 + $0x44] sm:$0xf]
    %v56 = vld [vmem:[#allocation5 + $0x48] sm:$0x77]
    %v57 = vld [vmem:[#allocation5 + $0x50] sm:$0x7]
    %v72 = vunpack.c.l.b16 %v44
    %v73 = vunpack.c.h.b16 %v44
    %v74 = vunpack.c.l.b16 %v45
    %v75 = vunpack.c.l.b16 %v46
    %v76 = vunpack.c.h.b16 %v46
    %v77 = vunpack.c.l.b16 %v47
    %v78 = vunpack.c.l.b16 %v48
    %v79 = vunpack.c.h.b16 %v48
    %v80 = vunpack.c.l.b16 %v49
    %v81 = vunpack.c.l.b16 %v50
    %v82 = vunpack.c.h.b16 %v50
    %v83 = vunpack.c.l.b16 %v51
    %v84 = vunpack.c.l.b16 %v52
    %v85 = vunpack.c.h.b16 %v52
    %v86 = vunpack.c.l.b16 %v53
    %v87 = vunpack.c.l.b16 %v54
    %v88 = vunpack.c.h.b16 %v54
    %v89 = vunpack.c.l.b16 %v55
    %v90 = vunpack.c.l.b16 %v56
    %v91 = vunpack.c.h.b16 %v56
    %v92 = vunpack.c.l.b16 %v57
    %v93 = vpack.c.b16 %v75, %v72
    %v94 = vpack.c.b16 %v76, %v73
    %v95 = vpack.c.b16 %v77, %v74
    %v96 = vpack.c.b16 %v81, %v78
    %v97 = vpack.c.b16 %v82, %v79
    %v98 = vpack.c.b16 %v83, %v80
    %v99 = vpack.c.b16 %v87, %v84
    %v100 = vpack.c.b16 %v88, %v85
    %v101 = vpack.c.b16 %v89, %v86
    %v102 = vpack.c.b16 %v90, %v90
    %v103 = vpack.c.b16 %v91, %v91
    %v104 = vpack.c.b16 %v92, %v92
    %vm114 = vcmask 441344
    %v116 = vsel %vm114, %v43, 0
    %vm118 = vcmask 1042432
    %v120 = vsel %vm118, %v102, 0
    %v123 = vsel %vm118, %v103, 0
    %v126 = vsel %vm118, %v104, 0
    %128 = vmatprep.subr.bf16.mxu0 0
    %129 = vmatpush1.bf16.msra.mxu0 0
    %130 = vmatprep.subr.bf16.mxu0 0
    %131 = vmatpush1.bf16.msra.mxu0 0
    %132 = vmatprep.subr.bf16.mxu0 0
    %133 = vmatpush1.bf16.msra.mxu0 0
    %134 = vmatprep.subr.bf16.mxu0 0
    %135 = vmatpush1.bf16.msra.mxu0 0
    %136 = vmatprep.subr.bf16.mxu0 %v123
    %137 = vmatpush1.bf16.msra.mxu0 %v120
    %138 = vmatprep.subr.bf16.mxu0 %v100
    %139 = vmatpush1.bf16.msra.mxu0 %v99
    %140 = vmatprep.subr.bf16.mxu0 %v97
    %141 = vmatpush1.bf16.msra.mxu0 %v96
    %142 = vmatprep.subr.bf16.mxu0 %v94
    %143 = vmatpush1.bf16.msra.mxu0 %v93
    %144 = vmatprep.subr.bf16.mxu0 0
    %145 = vmatpush2.bf16.msra.mxu0 0
    %146 = vmatprep.subr.bf16.mxu0 0
    %147 = vmatpush2.bf16.msra.mxu0 0
    %148 = vmatprep.subr.bf16.mxu0 0
    %149 = vmatpush2.bf16.msra.mxu0 0
    %150 = vmatprep.subr.bf16.mxu0 0
    %151 = vmatpush2.bf16.msra.mxu0 0
    %152 = vmatprep.subr.bf16.mxu0 0
    %153 = vmatpush2.bf16.msra.mxu0 0
    %154 = vmatprep.subr.bf16.mxu0 0
    %155 = vmatpush2.bf16.msra.mxu0 0
    %156 = vmatprep.subr.bf16.mxu0 0
    %157 = vmatpush2.bf16.msra.mxu0 0
    %158 = vmatprep.subr.bf16.mxu0 0
    %159 = vmatpush2.bf16.msra.mxu0 0
    %160 = vmatprep.mubr.bf16.mxu0 0
    %161 = vmatmul.mubr.bf16.gmra.mxu0 %v116
    %v162 = vpop.f32.mrf.mxu0
    %v163 = vadd.f32 0.0, %v162
    %v164 = vpop.f32.mrf.mxu0
    %v165 = vadd.f32 0.0, %v164
    %v166 = vpop.f32.mrf.mxu0
    %v167 = vpop.f32.mrf.mxu0
    %168 = vdwg.mxu0
    %169 = vmatprep.subr.bf16.mxu0 0
    %170 = vmatpush1.bf16.msra.mxu0 0
    %171 = vmatprep.subr.bf16.mxu0 0
    %172 = vmatpush1.bf16.msra.mxu0 0
    %173 = vmatprep.subr.bf16.mxu0 0
    %174 = vmatpush1.bf16.msra.mxu0 0
    %175 = vmatprep.subr.bf16.mxu0 0
    %176 = vmatpush1.bf16.msra.mxu0 0
    %177 = vmatprep.subr.bf16.mxu0 0
    %178 = vmatpush1.bf16.msra.mxu0 %v126
    %179 = vmatprep.subr.bf16.mxu0 0
    %180 = vmatpush1.bf16.msra.mxu0 %v101
    %181 = vmatprep.subr.bf16.mxu0 0
    %182 = vmatpush1.bf16.msra.mxu0 %v98
    %183 = vmatprep.subr.bf16.mxu0 0
    %184 = vmatpush1.bf16.msra.mxu0 %v95
    %185 = vmatprep.subr.bf16.mxu0 0
    %186 = vmatpush2.bf16.msra.mxu0 0
    %187 = vmatprep.subr.bf16.mxu0 0
    %188 = vmatpush2.bf16.msra.mxu0 0
    %189 = vmatprep.subr.bf16.mxu0 0
    %190 = vmatpush2.bf16.msra.mxu0 0
    %191 = vmatprep.subr.bf16.mxu0 0
    %192 = vmatpush2.bf16.msra.mxu0 0
    %193 = vmatprep.subr.bf16.mxu0 0
    %194 = vmatpush2.bf16.msra.mxu0 0
    %195 = vmatprep.subr.bf16.mxu0 0
    %196 = vmatpush2.bf16.msra.mxu0 0
    %197 = vmatprep.subr.bf16.mxu0 0
    %198 = vmatpush2.bf16.msra.mxu0 0
    %199 = vmatprep.subr.bf16.mxu0 0
    %200 = vmatpush2.bf16.msra.mxu0 0
    %201 = vmatprep.mubr.bf16.mxu0 0
    %202 = vmatmul.mubr.bf16.gmra.mxu0 %v116
    %v203 = vpop.f32.mrf.mxu0
    %v204 = vadd.f32 0.0, %v203
    %v205 = vpop.f32.mrf.mxu0
    %v206 = vpop.f32.mrf.mxu0
    %v207 = vpop.f32.mrf.mxu0
    %208 = vdwg.mxu0
    %v209 = vld [vmem:[%s2] sm:$0x7]
    %v211 = vlaneseq
    %v212 = vshrl.u32 %v211, 7
    %v213 = vsub.s32 0, %v212
    %v214 = vrot.slane %v209, %v213
    %v215 = vlaneseq
    %v216 = vshrl.u32 %v215, 7
    %v217 = vsub.s32 1, %v216
    %v218 = vrot.slane %v209, %v217
    %v219 = vlaneseq
    %v220 = vshrl.u32 %v219, 7
    %v221 = vsub.s32 2, %v220
    %v222 = vrot.slane %v209, %v221
    %vm226 = vcmp.eq.f32.partialorder %v163, %v214
    %vm227 = vcmp.eq.f32.partialorder %v165, %v218
    %vm228 = vcmp.eq.f32.partialorder %v204, %v222
    %v229 = vsel %vm226, 1, 0
    %v230 = vsel %vm227, 1, 0
    %v231 = vsel %vm228, 1, 0
    %v232 = vcvt.s32.f32 %v229
    %v233 = vcvt.s32.f32 %v230
    %v234 = vcvt.s32.f32 %v231
    %235 = vst [vmem:[#allocation7] sm:$0xff] %v232
    %236 = vst [vmem:[#allocation7 + $0x8] sm:$0xff] %v233
    %vm237 = vcmask 556032
    %238 = vst.msk [vmem:[#allocation7 + $0x10] sm:$0xff] %vm237, %v234
    // Predicated region
    $region22: #{tpu_custom_call.1} parent=1 // pred_check
      _
    $region23: #{tpu_custom_call.1} parent=1 // pred_check_branch
      %240 = sbr.rel (0) target = $region25
    $region24: #{tpu_custom_call.1} parent=1 // pred_region
      %s242 = ssub.s32 384, 384
      %243 = vsyncadd [#allocation4], %s242
      %s245 = sshll.u32 [#allocation7], 4
      %s246 = int_to_ptr.vmem [resolvable:$true] %s245
      %248 = dma.vmem_to_hbm [thread:$0]  %s246, 384, %s3, [#allocation4]
    $region25: #{tpu_custom_call.1} parent=1 // pred_fallthru
      _
    // Predicated region
    $region26: #{tpu_custom_call.1} parent=1 // pred_check
      _
    $region27: #{tpu_custom_call.1} parent=1 // pred_check_branch
      %250 = sbr.rel (0) target = $region29
    $region28: #{tpu_custom_call.1} parent=1 // pred_region
      %251 = dma.done [#allocation4], 384
    $region29: #{tpu_custom_call.1} parent=1 // pred_fallthru
      _
    %252 = vsyncpa [#allocation3], 1
    %253 = vsyncpa [#allocation6], 1
    %254 = vsyncpa [#allocation4], 1

</llo_original>
